<compile_context>
chip_gen: v5e
topology: v5e:2x2
jax: 0.10.0
libtpu: 0.0.40
codegen_flags: <defaults>
</compile_context>

<pallas_src>
import functools

import jax
import jax.numpy as jnp
import numpy as np
from jax import lax
from jax.experimental import pallas as pl
from jax.experimental.pallas import tpu as pltpu


# ----------------------- encoder stand-in: patch conv as matmul -----------------------
def _enc_kernel(x_ref, w_ref, b_ref, o_ref):
    acc = jnp.dot(x_ref[...], w_ref[...], preferred_element_type=jnp.float32)
    o_ref[...] = jnp.maximum(acc + b_ref[...], 0.0).astype(o_ref.dtype)


def encoder_forward(images, w_enc, b_enc, patch):
    """Returns a feature map [B, Hf*Wf, C] in bf16."""
    B, Cin, Himg, Wimg = images.shape
    Hf, Wf = Himg // patch, Wimg // patch
    # im2col glue over non-overlapping patches (NCHW -> [B*Hf*Wf, Cin*patch*patch]).
    x = images.reshape(B, Cin, Hf, patch, Wf, patch)
    x = x.transpose(0, 2, 4, 1, 3, 5).reshape(B * Hf * Wf, Cin * patch * patch)
    x = x.astype(jnp.bfloat16)                         # halve the mem-bound input DMA
    M, K = x.shape
    C = w_enc.shape[1]

    # Fixed tile + zero-padded tail (covers every row; old divisor-search could drop rows).
    tm = 256 if M >= 256 else ((M + 7) // 8) * 8
    M_pad = pl.cdiv(M, tm) * tm
    if M_pad != M:
        x = jnp.pad(x, ((0, M_pad - M), (0, 0)))

    out = pl.pallas_call(
        _enc_kernel,
        out_shape=jax.ShapeDtypeStruct((M_pad, C), jnp.bfloat16),
        grid=(M_pad // tm,),
        in_specs=[
            pl.BlockSpec((tm, K), lambda i: (i, 0)),   # im2col rows, tiled over M
            pl.BlockSpec((K, C), lambda i: (0, 0)),    # weights resident
            pl.BlockSpec((1, C), lambda i: (0, 0)),    # bias resident
        ],
        out_specs=pl.BlockSpec((tm, C), lambda i: (i, 0)),
        compiler_params=pltpu.CompilerParams(dimension_semantics=("parallel",)),
    )(x, w_enc.astype(jnp.bfloat16), b_enc.reshape(1, C).astype(jnp.float32))

    feat = out[:M].reshape(B, Hf * Wf, C)              # [B, HW, C] bf16
    return feat, Hf, Wf


# --------------------------------- decoder kernel --------------------------------------
def _decoder_kernel(Hf, Wf,
                    wbfeat_ref, pts_ref,
                    w1h_ref, w2h_ref, w3h_ref, woh_ref,
                    wp_ref, bias_ref,
                    out_ref):
    HW = Hf * Wf
    bf16 = jnp.bfloat16
    wbfeat = wbfeat_ref[0]                    # [H, HW]  bf16, resident per batch elem
    pts_raw = pts_ref[0]                      # [3, TP]  f32 points (transposed)
    TP = pts_raw.shape[1]

    # point_spheres = points * [1, -1, 1]   (rows: x, y, z; points live in lanes)
    row = lax.broadcasted_iota(jnp.int32, pts_raw.shape, 0)
    pts = jnp.where(row == 1, -pts_raw, pts_raw)              # [3, TP]
    p0 = pts[0:1, :]                                          # x   [1, TP]
    p1 = pts[1:2, :]                                          # y
    p2 = pts[2:3, :]                                          # z

    # ---- vert_align == grid_sample(bilinear, padding=zeros, align_corners=True) ----
    ix = (p0 + 1.0) * (0.5 * (Wf - 1))        # x -> width
    iy = (p1 + 1.0) * (0.5 * (Hf - 1))        # y -> height
    ix0f = jnp.floor(ix)
    iy0f = jnp.floor(iy)
    wx1 = ix - ix0f
    wx0 = 1.0 - wx1
    wy1 = iy - iy0f
    wy0 = 1.0 - wy1
    ix0 = ix0f.astype(jnp.int32)
    iy0 = iy0f.astype(jnp.int32)
    vx0 = (ix0 >= 0) & (ix0 < Wf)
    vx1 = (ix0 >= -1) & (ix0 < Wf - 1)        # validity of ix0 + 1
    vy0 = (iy0 >= 0) & (iy0 < Hf)
    vy1 = (iy0 >= -1) & (iy0 < Hf - 1)        # validity of iy0 + 1
    # Fold validity into the bilinear weights once on the [1, TP] columns; cast to
    # bf16 here so S is built directly in bf16 (no [HW, TP] f32->bf16 pass).
    w00 = jnp.where(vy0 & vx0, wy0 * wx0, 0.0).astype(bf16)
    w01 = jnp.where(vy0 & vx1, wy0 * wx1, 0.0).astype(bf16)
    w10 = jnp.where(vy1 & vx0, wy1 * wx0, 0.0).astype(bf16)
    w11 = jnp.where(vy1 & vx1, wy1 * wx1, 0.0).astype(bf16)
    idx00 = iy0 * Wf + ix0                    # base corner; others at +1 / +Wf / +Wf+1

    # Sparse sampling matrix S (bf16): one compare + one select per corner on [HW, TP].
    hw_iota = lax.broadcasted_iota(jnp.int32, (HW, TP), 0)
    _z = jnp.zeros((), dtype=bf16)
    S = (jnp.where(hw_iota == idx00, w00, _z)
         + jnp.where(hw_iota == idx00 + 1, w01, _z)
         + jnp.where(hw_iota == idx00 + Wf, w10, _z)
         + jnp.where(hw_iota == idx00 + (Wf + 1), w11, _z))   # [HW, TP] bf16

    # Packed small operands (sliced statically; free).
    wp_all = wp_ref[...]                      # [H, 16] f32
    bb = bias_ref[:, 0:1]                     # [H, 1]

    def pts_term(wp):
        # wp: [Nout, 3] f32 -> three rank-1 broadcast FMAs on the VPU (no K=3 matmul).
        # NOTE: at very small H this VPU epilogue can become the binding slot; fold it
        # into a K=8 MXU matmul in that regime (at production H=512 keep it here).
        return wp[:, 0:1] * p0 + wp[:, 1:2] * p1 + wp[:, 2:3] * p2

    # Fused sampling + bottleneck:  relu(wb^T @ (feat @ S) + bb) == relu((wb^T@feat) @ S + bb)
    h = jnp.maximum(
        jnp.dot(wbfeat, S, preferred_element_type=jnp.float32) + bb,
        0.0)                                                  # [H, TP] f32

    # fc1..fc3:  cat([h, pts]) @ W  ==  Wh @ h + Wp @ pts  (Wp part done on the VPU)
    for wh_ref, wp, b in ((w1h_ref, wp_all[:, 0:3], bias_ref[:, 1:2]),
                          (w2h_ref, wp_all[:, 3:6], bias_ref[:, 2:3]),
                          (w3h_ref, wp_all[:, 6:9], bias_ref[:, 3:4])):
        h = jnp.maximum(
            jnp.dot(wh_ref[...], h.astype(bf16),
                    preferred_element_type=jnp.float32)
            + pts_term(wp) + b,
            0.0)

    off = jnp.tanh(
        jnp.dot(woh_ref[...], h.astype(bf16),
                preferred_element_type=jnp.float32)
        + pts_term(wp_all[0:3, 9:12]) + bias_ref[0:3, 4:5])   # [3, TP]

    out_ref[0] = (pts + off).astype(out_ref.dtype)            # lane-dense store


def decoder_forward(feat_hwc, points_b, params, Hf, Wf, *, tp=256):
    B, HW, C = feat_hwc.shape
    assert HW == Hf * Wf
    P = points_b.shape[1]
    assert P % tp == 0, "TODO(synk): pad P to a multiple of the point-tile size"

    wb, bb, w1, b1, w2, b2, w3, b3, wo, bo = params
    H = wb.shape[1]
    bf16 = jnp.bfloat16

    # Fused sampling+bottleneck precompute (wrapper-side, so both grid axes stay
    # "parallel"):  wbfeat[b] = wb^T @ feat[b]   -> [B, H, HW] bf16 (f32 accumulate).
    wbfeat = jnp.einsum('ch,bwc->bhw', wb.astype(bf16), feat_hwc,
                        preferred_element_type=jnp.float32).astype(bf16)

    # Pre-split + pre-transpose the concatenated weights (free wrapper-side work):
    #   [H+3, Nout] -> (whT [Nout, H] bf16 for the MXU, wpT [Nout, 3] f32 for VPU FMAs)
    def split_t(w):
        return w[:H, :].T.astype(bf16), w[H:, :].T.astype(jnp.float32)

    w1h, w1p = split_t(w1)
    w2h, w2p = split_t(w2)
    w3h, w3p = split_t(w3)
    woh, wop = split_t(wo)

    # Pack the lane-padded small operands (each (H,3)/(H,1) block would pad lanes to
    # 128 in VMEM and be double-buffered; packing saves VMEM + DMA descriptors).
    wp_packed = jnp.zeros((H, 16), jnp.float32)
    wp_packed = wp_packed.at[:, 0:3].set(w1p)
    wp_packed = wp_packed.at[:, 3:6].set(w2p)
    wp_packed = wp_packed.at[:, 6:9].set(w3p)
    wp_packed = wp_packed.at[0:3, 9:12].set(wop)

    bias_packed = jnp.zeros((H, 8), jnp.float32)
    bias_packed = bias_packed.at[:, 0].set(bb)
    bias_packed = bias_packed.at[:, 1].set(b1)
    bias_packed = bias_packed.at[:, 2].set(b2)
    bias_packed = bias_packed.at[:, 3].set(b3)
    bias_packed = bias_packed.at[0:3, 4].set(bo)

    pts_t = jnp.transpose(points_b, (0, 2, 1)).astype(jnp.float32)   # [B, 3, P]

    def full(shape):
        # Constant-index blocks (weights / packed operands): resident across the grid.
        # NOTE: on v7x, pipeline_mode=pl.Buffered(1) on these specs would drop the
        # unnecessary double-buffer copy (~2-3 MB at production sizes).
        return pl.BlockSpec(shape, lambda b, p: (0,) * len(shape))

    kern = functools.partial(_decoder_kernel, Hf, Wf)
    out_t = pl.pallas_call(
        kern,
        out_shape=jax.ShapeDtypeStruct((B, 3, P), jnp.float32),
        grid=(B, P // tp),                      # P tiled; p is the fast axis so wbfeat
        in_specs=[                              # is fetched once per batch element.
            pl.BlockSpec((1, H, HW), lambda b, p: (b, 0, 0)),  # wbfeat: resident over p
            pl.BlockSpec((1, 3, tp), lambda b, p: (b, 0, p)),  # point tile
            full((H, H)), full((H, H)), full((H, H)), full((3, H)),
            full((H, 16)), full((H, 8)),
        ],
        out_specs=pl.BlockSpec((1, 3, tp), lambda b, p: (b, 0, p)),
        compiler_params=pltpu.CompilerParams(
            # Both axes independent (precompute is in the wrapper), so v7x dual-TC can
            # split P tiles as well as batch.
            dimension_semantics=("parallel", "parallel"),
            # NOTE: production sizes (H=512, HW=49, P=10000): use tp=1024-2048 (multiple
            # of 256); post-fusion per-tile temporaries are ~6-8 MB, fine everywhere —
            # raise vmem_limit_bytes on v5e (16 MiB default scoped) if needed.
        ),
    )(wbfeat, pts_t, w1h, w2h, w3h, woh, wp_packed, bias_packed)

    return jnp.transpose(out_t, (0, 2, 1))                    # [B, P, 3]


def pointalign_forward(images, points_b, w_enc, b_enc, dec_params, patch, *, tp=256):
    feat_hwc, Hf, Wf = encoder_forward(images, w_enc, b_enc, patch)
    return decoder_forward(feat_hwc, points_b, dec_params, Hf, Wf, tp=tp)


# ------------------------------------- main ---------------------------------------------
if __name__ == "__main__":
    B, Cin, Himg, Wimg = 2, 3, 32, 32
    patch = 4                      # stand-in downsampling for resnet50's /32
    feat_dim = 128                 # stands in for input_dim = 2048
    hidden = 128                   # stands in for hidden_dim = 512
    P = 256                        # stands in for 10000 sphere points
    TP = 256                       # point tile; multiple of 256 (production: 1024-2048)
    Hf, Wf = Himg // patch, Wimg // patch

    key = jax.random.PRNGKey(0)
    keys = jax.random.split(key, 16)
    images = jax.random.normal(keys[0], (B, Cin, Himg, Wimg), jnp.float32)
    points = jax.random.normal(keys[1], (1, P, 3), jnp.float32)       # self.points buffer
    points_b = jnp.tile(points, (B, 1, 1))                            # .repeat(B, 1, 1)

    def lin(kw, kb, fan_in, fan_out):
        bound = 1.0 / np.sqrt(fan_in)
        w = jax.random.uniform(kw, (fan_in, fan_out), jnp.float32, -bound, bound)
        b = jax.random.uniform(kb, (fan_out,), jnp.float32, -bound, bound)
        return w, b

    w_enc, b_enc = lin(keys[2], keys[3], Cin * patch * patch, feat_dim)
    wb, bb = lin(keys[4], keys[5], feat_dim, hidden)
    w1, b1 = lin(keys[6], keys[7], hidden + 3, hidden)
    w2, b2 = lin(keys[8], keys[9], hidden + 3, hidden)
    w3, b3 = lin(keys[10], keys[11], hidden + 3, hidden)
    wo, bo = lin(keys[12], keys[13], hidden + 3, 3)
    dec_params = (wb, bb, w1, b1, w2, b2, w3, b3, wo, bo)

    out = pointalign_forward(images, points_b, w_enc, b_enc, dec_params, patch, tp=TP)
    out = jax.block_until_ready(out)

    # ----------------------------- plain-JAX f32 reference -----------------------------
    hi = jax.lax.Precision.HIGHEST
    x = images.reshape(B, Cin, Hf, patch, Wf, patch)
    x = x.transpose(0, 2, 4, 1, 3, 5).reshape(B * Hf * Wf, Cin * patch * patch)
    feat_ref = jax.nn.relu(jnp.matmul(x, w_enc, precision=hi) + b_enc)
    feat_ref = feat_ref.reshape(B, Hf, Wf, feat_dim)

    pts = points_b * jnp.array([1.0, -1.0, 1.0], jnp.float32)
    gx, gy = pts[..., 0], pts[..., 1]
    ix = (gx + 1.0) * 0.5 * (Wf - 1)
    iy = (gy + 1.0) * 0.5 * (Hf - 1)
    ix0f, iy0f = jnp.floor(ix), jnp.floor(iy)
    wx1, wy1 = ix - ix0f, iy - iy0f
    wx0, wy0 = 1.0 - wx1, 1.0 - wy1
    ix0, iy0 = ix0f.astype(jnp.int32), iy0f.astype(jnp.int32)
    ix1, iy1 = ix0 + 1, iy0 + 1

    def gather(iyc, ixc):
        valid = ((ixc >= 0) & (ixc < Wf) & (iyc >= 0) & (iyc < Hf)).astype(jnp.float32)
        yy = jnp.clip(iyc, 0, Hf - 1)
        xx = jnp.clip(ixc, 0, Wf - 1)
        vals = jax.vmap(lambda f, y, x_: f[y, x_])(feat_ref, yy, xx)   # [B, P, C]
        return vals * valid[..., None]

    samp = (gather(iy0, ix0) * (wy0 * wx0)[..., None]
            + gather(iy0, ix1) * (wy0 * wx1)[..., None]
            + gather(iy1, ix0) * (wy1 * wx0)[..., None]
            + gather(iy1, ix1) * (wy1 * wx1)[..., None])
    h = jax.nn.relu(jnp.matmul(samp, wb, precision=hi) + bb)
    h = jax.nn.relu(jnp.matmul(jnp.concatenate([h, pts], -1), w1, precision=hi) + b1)
    h = jax.nn.relu(jnp.matmul(jnp.concatenate([h, pts], -1), w2, precision=hi) + b2)
    h = jax.nn.relu(jnp.matmul(jnp.concatenate([h, pts], -1), w3, precision=hi) + b3)
    off = jnp.tanh(jnp.matmul(jnp.concatenate([h, pts], -1), wo, precision=hi) + bo)
    ref = pts + off

    # bf16 matmul operands (f32 accumulation) + fused bottleneck vs the f32 reference
    # -> relaxed tolerance.
    np.testing.assert_allclose(np.asarray(out), np.asarray(ref), rtol=2e-2, atol=2e-2)
    print("KERNEL_OK")
</pallas_src>

<mosaic_0001>
module attributes {stable_mosaic.version = 11 : i64} {
  func.func @_enc_kernel(%arg0: i32, %arg1: memref<128x48xbf16, #tpu.memory_space<vmem>>, %arg2: memref<48x128xbf16, #tpu.memory_space<vmem>>, %arg3: memref<1x128xf32, #tpu.memory_space<vmem>>, %arg4: memref<128x128xbf16, #tpu.memory_space<vmem>>) attributes {dimension_semantics = [#tpu.dimension_semantics<parallel>], iteration_bounds = array<i64: 1>, scalar_prefetch = 0 : i64, scratch_operands = 0 : i64, tpu.core_type = #tpu.core_type<tc>, window_params = [{transform_indices = @transform_0, window_bounds = array<i64: 128, 48>}, {pipeline_mode = #tpu.pipeline_mode<synchronous>, transform_indices = @transform_1, window_bounds = array<i64: 48, 128>}, {pipeline_mode = #tpu.pipeline_mode<synchronous>, transform_indices = @transform_2, window_bounds = array<i64: 1, 128>}, {transform_indices = @transform_3, window_bounds = array<i64: 128, 128>}]} {
    %c0 = arith.constant 0 : index
    %c0_0 = arith.constant 0 : index
    %0 = vector.load %arg1[%c0, %c0_0] : memref<128x48xbf16, #tpu.memory_space<vmem>>, vector<128x48xbf16>
    %c0_1 = arith.constant 0 : index
    %c0_2 = arith.constant 0 : index
    %1 = vector.load %arg2[%c0_1, %c0_2] : memref<48x128xbf16, #tpu.memory_space<vmem>>, vector<48x128xbf16>
    %cst = arith.constant dense<0.000000e+00> : vector<128x128xf32>
    %2 = tpu.matmul %0, %1, %cst {dimension_numbers = #tpu.dot_dimension_numbers<[1], [0], [0], [1], [0, 0, 1, 1], [], []>} : vector<128x48xbf16>, vector<48x128xbf16>, vector<128x128xf32> -> vector<128x128xf32>
    %c0_3 = arith.constant 0 : index
    %c0_4 = arith.constant 0 : index
    %3 = vector.load %arg3[%c0_3, %c0_4] : memref<1x128xf32, #tpu.memory_space<vmem>>, vector<1x128xf32>
    %4 = vector.broadcast %3 : vector<1x128xf32> to vector<128x128xf32>
    %5 = arith.addf %2, %4 : vector<128x128xf32>
    %cst_5 = arith.constant 0.000000e+00 : f32
    %6 = vector.broadcast %cst_5 : f32 to vector<128x128xf32>
    %7 = arith.maximumf %5, %6 : vector<128x128xf32>
    %8 = arith.truncf %7 : vector<128x128xf32> to vector<128x128xbf16>
    %c0_6 = arith.constant 0 : index
    %c0_7 = arith.constant 0 : index
    %9 = vector.load %arg4[%c0_6, %c0_7] : memref<128x128xbf16, #tpu.memory_space<vmem>>, vector<128x128xbf16>
    tpu.vector_store %arg4[%c0_6, %c0_7], %8 {strides = array<i32>} : memref<128x128xbf16, #tpu.memory_space<vmem>>, vector<128x128xbf16>,
    return
  }
  func.func @transform_0(%arg0: i32) -> (i32, i32) {
    %c0_i32 = arith.constant 0 : i32
    %c0_i32_0 = arith.constant 0 : i32
    return %arg0, %c0_i32 : i32, i32
  }
  func.func @transform_1(%arg0: i32) -> (i32, i32) {
    %c0_i32 = arith.constant 0 : i32
    %c0_i32_0 = arith.constant 0 : i32
    %c0_i32_1 = arith.constant 0 : i32
    return %c0_i32, %c0_i32_0 : i32, i32
  }
  func.func @transform_2(%arg0: i32) -> (i32, i32) {
    %c0_i32 = arith.constant 0 : i32
    %c0_i32_0 = arith.constant 0 : i32
    %c0_i32_1 = arith.constant 0 : i32
    return %c0_i32, %c0_i32_0 : i32, i32
  }
  func.func @transform_3(%arg0: i32) -> (i32, i32) {
    %c0_i32 = arith.constant 0 : i32
    %c0_i32_0 = arith.constant 0 : i32
    return %arg0, %c0_i32 : i32, i32
  }
}

</mosaic_0001>

<llo_original>
// kernel: tpu_custom_call.1
$region0: #{tpu_custom_call.1}
  #allocation0 [shape = 'u32[]', space=smem, size = 0x4, offset = 0x4, fixed_abs, tag = 'smem constant byte address 0x4 - core index']
  #allocation1 [shape = 'u32[72,128]{1,0:T(1,128)}', space=vmem, size = 0x9000, scoped, tag = 'internal scratch']
  %s0 = inlined_call_operand.vmem [shape: bf16[128,48], index: 0, kind: input, shape index: {}]
  %s1 = inlined_call_operand.vmem [shape: bf16[48,128], index: 1, kind: input, shape index: {}]
  %s2 = inlined_call_operand.vmem [shape: f32[1,128], index: 2, kind: input, shape index: {}]
  %s3 = inlined_call_operand.hbm [shape: bf16[128,128], index: 3, kind: output, shape index: {}]
  %s4 = sld [smem:[#allocation0]]
  $region22: #{tpu_custom_call.1} parent=0
    _
  %s6 = ssub.s32 1, %s4
  %s7 = scalar_select 0, %s6, %s4
  $region1: #{tpu_custom_call.1} parent=0
    #allocation2 [shape = 'u8[32768]{0}', space=vmem, size = 0x8000, scoped, tag = 'output window, operand 0, single buffered']
    #allocation3 [shape = 's32[1]{0}', space=sflag, size = 0x4, scoped, tag = 'scoped memory for tpu_custom_call.1']
    %8 = vsyncpa [#allocation3], 0
    // Predicated region
    $region2: #{tpu_custom_call.1} parent=1 // pred_check
      _
    $region3: #{tpu_custom_call.1} parent=1 // pred_check_branch
      %10 = sbr.rel (0) target = $region5
    $region4: #{tpu_custom_call.1} parent=1 // pred_region
      _
    $region5: #{tpu_custom_call.1} parent=1 // pred_fallthru
      _
    // Predicated region
    $region6: #{tpu_custom_call.1} parent=1 // pred_check
      _
    $region7: #{tpu_custom_call.1} parent=1 // pred_check_branch
      %12 = sbr.rel (0) target = $region9
    $region8: #{tpu_custom_call.1} parent=1 // pred_region
      _
    $region9: #{tpu_custom_call.1} parent=1 // pred_fallthru
      _
    // Predicated region
    $region10: #{tpu_custom_call.1} parent=1 // pred_check
      _
    $region11: #{tpu_custom_call.1} parent=1 // pred_check_branch
      %14 = sbr.rel (0) target = $region13
    $region12: #{tpu_custom_call.1} parent=1 // pred_region
      _
    $region13: #{tpu_custom_call.1} parent=1 // pred_fallthru
      _
    %v16 = vld [vmem:[%s0] sm:$0xf]
    %v17 = vld [vmem:[%s0 + $0x4] sm:$0xf]
    %v18 = vld [vmem:[%s0 + $0x8] sm:$0xf]
    %v19 = vld [vmem:[%s0 + $0xc] sm:$0xf]
    %v20 = vld [vmem:[%s0 + $0x10] sm:$0xf]
    %v21 = vld [vmem:[%s0 + $0x14] sm:$0xf]
    %v22 = vld [vmem:[%s0 + $0x18] sm:$0xf]
    %v23 = vld [vmem:[%s0 + $0x1c] sm:$0xf]
    %v24 = vld [vmem:[%s0 + $0x20] sm:$0xf]
    %v25 = vld [vmem:[%s0 + $0x24] sm:$0xf]
    %v26 = vld [vmem:[%s0 + $0x28] sm:$0xf]
    %v27 = vld [vmem:[%s0 + $0x2c] sm:$0xf]
    %v28 = vld [vmem:[%s0 + $0x30] sm:$0xf]
    %v29 = vld [vmem:[%s0 + $0x34] sm:$0xf]
    %v30 = vld [vmem:[%s0 + $0x38] sm:$0xf]
    %v31 = vld [vmem:[%s0 + $0x3c] sm:$0xf]
    %v32 = vld [vmem:[%s1] sm:$0xf]
    %v33 = vld [vmem:[%s1 + $0x4] sm:$0xf]
    %v34 = vld [vmem:[%s1 + $0x8] sm:$0xf]
    %v35 = vld [vmem:[%s1 + $0xc] sm:$0xf]
    %v36 = vld [vmem:[%s1 + $0x10] sm:$0xf]
    %v37 = vld [vmem:[%s1 + $0x14] sm:$0xf]
    %v38 = vld [vmem:[%s2] sm:$0x1]
    %v40 = vperm.slane %v38, 0
    %v58 = vunpack.c.l.b16 %v16
    %v59 = vunpack.c.l.b16 %v17
    %v60 = vunpack.c.l.b16 %v18
    %v61 = vunpack.c.l.b16 %v19
    %v62 = vunpack.c.l.b16 %v20
    %v63 = vunpack.c.l.b16 %v21
    %v64 = vunpack.c.l.b16 %v22
    %v65 = vunpack.c.l.b16 %v23
    %v66 = vunpack.c.l.b16 %v24
    %v67 = vunpack.c.l.b16 %v25
    %v68 = vunpack.c.l.b16 %v26
    %v69 = vunpack.c.l.b16 %v27
    %v70 = vunpack.c.l.b16 %v28
    %v71 = vunpack.c.l.b16 %v29
    %v72 = vunpack.c.l.b16 %v30
    %v73 = vunpack.c.l.b16 %v31
    %v74 = vpack.c.b16 %v59, %v58
    %v75 = vpack.c.b16 %v61, %v60
    %v76 = vpack.c.b16 %v63, %v62
    %v77 = vpack.c.b16 %v65, %v64
    %v78 = vpack.c.b16 %v67, %v66
    %v79 = vpack.c.b16 %v69, %v68
    %v80 = vpack.c.b16 %v71, %v70
    %v81 = vpack.c.b16 %v73, %v72
    %v88 = vunpack.c.l.b16 %v32
    %v89 = vunpack.c.l.b16 %v33
    %v90 = vunpack.c.l.b16 %v34
    %v91 = vunpack.c.l.b16 %v35
    %v92 = vunpack.c.l.b16 %v36
    %v93 = vunpack.c.l.b16 %v37
    %v94 = vpack.c.b16 %v89, %v88
    %v95 = vpack.c.b16 %v91, %v90
    %v96 = vpack.c.b16 %v93, %v92
    %vm100 = vcmask 392192
    %v102 = vsel %vm100, %v74, 0
    %v105 = vsel %vm100, %v75, 0
    %v108 = vsel %vm100, %v76, 0
    %v111 = vsel %vm100, %v77, 0
    %v114 = vsel %vm100, %v78, 0
    %v117 = vsel %vm100, %v79, 0
    %v120 = vsel %vm100, %v80, 0
    %v123 = vsel %vm100, %v81, 0
    %125 = vmatpush.bf16.msra.mxu0 0
    %126 = vmatpush.bf16.msra.mxu0 0
    %127 = vmatpush.bf16.msra.mxu0 0
    %128 = vmatpush.bf16.msra.mxu0 0
    %129 = vmatpush.bf16.msra.mxu0 0
    %130 = vmatpush.bf16.msra.mxu0 %v96
    %131 = vmatpush.bf16.msra.mxu0 %v95
    %132 = vmatpush.bf16.msra.mxu0 %v94
    %133 = vmatmul.bf16.gmra.mxu0 %v102
    %v134 = vpop.f32.mrf.mxu0
    %v135 = vadd.f32 %v40, %v134
    %v136 = vpop.f32.mrf.mxu0
    %v137 = vadd.f32 %v40, %v136
    %138 = vmatmul.bf16.gmra.mxu0 %v105
    %v139 = vpop.f32.mrf.mxu0
    %v140 = vadd.f32 %v40, %v139
    %v141 = vpop.f32.mrf.mxu0
    %v142 = vadd.f32 %v40, %v141
    %143 = vmatmul.bf16.gmra.mxu0 %v108
    %v144 = vpop.f32.mrf.mxu0
    %v145 = vadd.f32 %v40, %v144
    %v146 = vpop.f32.mrf.mxu0
    %v147 = vadd.f32 %v40, %v146
    %148 = vmatmul.bf16.gmra.mxu0 %v111
    %v149 = vpop.f32.mrf.mxu0
    %v150 = vadd.f32 %v40, %v149
    %v151 = vpop.f32.mrf.mxu0
    %v152 = vadd.f32 %v40, %v151
    %153 = vmatmul.bf16.gmra.mxu0 %v114
    %v154 = vpop.f32.mrf.mxu0
    %v155 = vadd.f32 %v40, %v154
    %v156 = vpop.f32.mrf.mxu0
    %v157 = vadd.f32 %v40, %v156
    %158 = vmatmul.bf16.gmra.mxu0 %v117
    %v159 = vpop.f32.mrf.mxu0
    %v160 = vadd.f32 %v40, %v159
    %v161 = vpop.f32.mrf.mxu0
    %v162 = vadd.f32 %v40, %v161
    %163 = vmatmul.bf16.gmra.mxu0 %v120
    %v164 = vpop.f32.mrf.mxu0
    %v165 = vadd.f32 %v40, %v164
    %v166 = vpop.f32.mrf.mxu0
    %v167 = vadd.f32 %v40, %v166
    %168 = vmatmul.bf16.gmra.mxu0 %v123
    %v169 = vpop.f32.mrf.mxu0
    %v170 = vadd.f32 %v40, %v169
    %v171 = vpop.f32.mrf.mxu0
    %v172 = vadd.f32 %v40, %v171
    %173 = vdwg.mxu0
    %v174 = vmax.f32 %v135, 0.0
    %v175 = vmax.f32 %v137, 0.0
    %v176 = vmax.f32 %v140, 0.0
    %v177 = vmax.f32 %v142, 0.0
    %v178 = vmax.f32 %v145, 0.0
    %v179 = vmax.f32 %v147, 0.0
    %v180 = vmax.f32 %v150, 0.0
    %v181 = vmax.f32 %v152, 0.0
    %v182 = vmax.f32 %v155, 0.0
    %v183 = vmax.f32 %v157, 0.0
    %v184 = vmax.f32 %v160, 0.0
    %v185 = vmax.f32 %v162, 0.0
    %v186 = vmax.f32 %v165, 0.0
    %v187 = vmax.f32 %v167, 0.0
    %v188 = vmax.f32 %v170, 0.0
    %v189 = vmax.f32 %v172, 0.0
    %v190 = vpack.c.bf16 %v174, %v174
    %v191 = vpack.c.bf16 %v175, %v175
    %v192 = vpack.c.bf16 %v176, %v176
    %v193 = vpack.c.bf16 %v177, %v177
    %v194 = vpack.c.bf16 %v178, %v178
    %v195 = vpack.c.bf16 %v179, %v179
    %v196 = vpack.c.bf16 %v180, %v180
    %v197 = vpack.c.bf16 %v181, %v181
    %v198 = vpack.c.bf16 %v182, %v182
    %v199 = vpack.c.bf16 %v183, %v183
    %v200 = vpack.c.bf16 %v184, %v184
    %v201 = vpack.c.bf16 %v185, %v185
    %v202 = vpack.c.bf16 %v186, %v186
    %v203 = vpack.c.bf16 %v187, %v187
    %v204 = vpack.c.bf16 %v188, %v188
    %v205 = vpack.c.bf16 %v189, %v189
    %206 = vst [vmem:[#allocation2] sm:$0xf] %v190
    %207 = vst [vmem:[#allocation2 + $0x4] sm:$0xf] %v191
    %208 = vst [vmem:[#allocation2 + $0x8] sm:$0xf] %v192
    %209 = vst [vmem:[#allocation2 + $0xc] sm:$0xf] %v193
    %210 = vst [vmem:[#allocation2 + $0x10] sm:$0xf] %v194
    %211 = vst [vmem:[#allocation2 + $0x14] sm:$0xf] %v195
    %212 = vst [vmem:[#allocation2 + $0x18] sm:$0xf] %v196
    %213 = vst [vmem:[#allocation2 + $0x1c] sm:$0xf] %v197
    %214 = vst [vmem:[#allocation2 + $0x20] sm:$0xf] %v198
    %215 = vst [vmem:[#allocation2 + $0x24] sm:$0xf] %v199
    %216 = vst [vmem:[#allocation2 + $0x28] sm:$0xf] %v200
    %217 = vst [vmem:[#allocation2 + $0x2c] sm:$0xf] %v201
    %218 = vst [vmem:[#allocation2 + $0x30] sm:$0xf] %v202
    %219 = vst [vmem:[#allocation2 + $0x34] sm:$0xf] %v203
    %220 = vst [vmem:[#allocation2 + $0x38] sm:$0xf] %v204
    %221 = vst [vmem:[#allocation2 + $0x3c] sm:$0xf] %v205
    // Predicated region
    $region14: #{tpu_custom_call.1} parent=1 // pred_check
      _
    $region15: #{tpu_custom_call.1} parent=1 // pred_check_branch
      %223 = sbr.rel (0) target = $region17
    $region16: #{tpu_custom_call.1} parent=1 // pred_region
      %225 = vsyncadd [#allocation3], 0
      %s226 = sshll.u32 [#allocation2], 4
      %s227 = int_to_ptr.vmem [resolvable:$true] %s226
      %s228 = sshll.u32 %s3, 4
      %s229 = int_to_ptr.hbm [resolvable:$true] %s228
      %234 = dma.vmem_to_hbm [thread:$0]  %s227, 1024, %s229, [#allocation3], 64, 64, 4
    $region17: #{tpu_custom_call.1} parent=1 // pred_fallthru
      _
    // Predicated region
    $region18: #{tpu_custom_call.1} parent=1 // pred_check
      _
    $region19: #{tpu_custom_call.1} parent=1 // pred_check_branch
      %236 = sbr.rel (0) target = $region21
    $region20: #{tpu_custom_call.1} parent=1 // pred_region
      %238 = dma.done [#allocation3], 1024
    $region21: #{tpu_custom_call.1} parent=1 // pred_fallthru
      _
    %239 = vsyncpa [#allocation3], 1

</llo_original>
